<compile_context>
chip_gen: v5e
topology: v5e:2x2
jax: 0.10.0
libtpu: 0.0.40
codegen_flags: <defaults>
</compile_context>

<pallas_src>
import functools

import jax
import jax.numpy as jnp
from jax.experimental import pallas as pl
from jax.experimental.pallas import tpu as pltpu


def _norm_kernel(x_ref, alpha_ref, bias_ref, o_ref, *, eps):
    # x_ref    : (TM, D) tile of rows
    # alpha_ref: (1, D)  scale (resident across grid)
    # bias_ref : (1, D)  shift (resident across grid)
    # o_ref    : (TM, D) output tile
    x = x_ref[...].astype(jnp.float32)                       # (TM, D)
    d = x.shape[-1]

    # Fused one-sweep moments: sum(x) and sum(x*x) -> mean, unbiased variance.
    s1 = jnp.sum(x, axis=-1, keepdims=True)                  # (TM, 1)
    s2 = jnp.sum(x * x, axis=-1, keepdims=True)              # (TM, 1)
    mean = s1 * (1.0 / d)
    var = jnp.maximum(s2 - s1 * mean, 0.0) * (1.0 / max(d - 1, 1))
    std = jnp.sqrt(var)

    # Per-row exact reciprocal; eps is added to std (matches torch.std + eps).
    inv = 1.0 / (std + eps)                                  # (TM, 1)

    y = (x - mean) * inv * alpha_ref[...].astype(jnp.float32) \
        + bias_ref[...].astype(jnp.float32)
    o_ref[...] = y.astype(o_ref.dtype)


def _round_up(a, b):
    return ((a + b - 1) // b) * b


def _pick_row_tile(M, D, dtype):
    """Dtype/VMEM-aware row tile size for a memory-bound per-row norm."""
    itemsize = jnp.dtype(dtype).itemsize
    pack = max(8, 32 // itemsize)            # sublane pack: 8 f32 / 16 bf16 / 32 i8
    # Per-row VMEM cost: double-buffered in + out tiles plus ~3 f32 temporaries.
    per_row = 4 * D * itemsize + 12 * D
    vmem_budget = 20 * 1024 * 1024           # stays well under the 32 MiB scoped limit
    tm_vmem = max(pack, vmem_budget // per_row)
    # ~2 MiB of input HBM traffic per grid step amortizes per-step overhead.
    tm_traffic = max(pack, (2 * 1024 * 1024) // max(D * itemsize, 1))
    tm = min(tm_vmem, tm_traffic)
    tm = min(tm, _round_up(M, pack))
    tm = max(pack, (tm // pack) * pack)
    # Keep >= 2 grid steps when possible so "parallel" can shard across cores (v7x).
    while pl.cdiv(M, tm) < 2 and tm > pack:
        tm = max(pack, ((tm // 2) // pack) * pack)
    return tm


def norm_forward(x, alpha, bias, *, eps=1e-6):
    """y = alpha * (x - mean(x,-1)) / (std(x,-1,unbiased) + eps) + bias.

    x:     (..., d_model)
    alpha: (d_model,)
    bias:  (d_model,)
    returns same shape/dtype as x.
    """
    orig_shape = x.shape
    D = orig_shape[-1]
    M = 1
    for s in orig_shape[:-1]:
        M *= s
    x_flat = x.reshape(M, D)
    alpha2 = alpha.reshape(1, D)
    bias2 = bias.reshape(1, D)

    tm = _pick_row_tile(M, D, x.dtype)
    grid = (pl.cdiv(M, tm),)   # partial last block: OOB reads don't-care, writes masked

    itemsize = jnp.dtype(x.dtype).itemsize
    # TODO(synk): if d_model is not a multiple of 128, output stores become masked
    # partial vst; lane-padding with masked reductions is possible but not needed here.
    out_flat = pl.pallas_call(
        functools.partial(_norm_kernel, eps=eps),
        out_shape=jax.ShapeDtypeStruct((M, D), x.dtype),
        grid_spec=pltpu.PrefetchScalarGridSpec(
            num_scalar_prefetch=0,
            grid=grid,
            in_specs=[
                pl.BlockSpec((tm, D), lambda i: (i, 0)),   # row tile of x
                pl.BlockSpec((1, D), lambda i: (0, 0)),    # alpha (reused every step)
                pl.BlockSpec((1, D), lambda i: (0, 0)),    # bias  (reused every step)
            ],
            out_specs=pl.BlockSpec((tm, D), lambda i: (i, 0)),
        ),
        compiler_params=pltpu.CompilerParams(
            dimension_semantics=("parallel",),             # megacore-shardable rows
            vmem_limit_bytes=32 * 1024 * 1024,             # explicit, safe on v5e/v6e/v7x
        ),
        cost_estimate=pl.CostEstimate(
            flops=8 * M * D,
            transcendentals=M,                             # one sqrt per row
            bytes_accessed=2 * M * D * itemsize + 2 * D * 4,
        ),
    )(x_flat, alpha2, bias2)

    return out_flat.reshape(orig_shape)


if __name__ == "__main__":
    # Small shapes consistent with the module: (batch, seq, d_model).
    batch, seq, d_model = 2, 8, 128
    eps = 1e-6

    key = jax.random.PRNGKey(0)
    kx, ka, kb = jax.random.split(key, 3)

    x = jax.random.normal(kx, (batch, seq, d_model), dtype=jnp.float32)
    # Module initializes alpha=ones, bias=zeros; perturb deterministically so the
    # scale/shift path is actually exercised by the correctness check.
    alpha = 1.0 + 0.1 * jax.random.normal(ka, (d_model,), dtype=jnp.float32)
    bias = 0.1 * jax.random.normal(kb, (d_model,), dtype=jnp.float32)

    y = norm_forward(x, alpha, bias, eps=eps)
    y = jax.block_until_ready(y)

    # Reference (same math as the PyTorch module; torch.std is unbiased).
    mean = x.mean(axis=-1, keepdims=True)
    std = jnp.sqrt(jnp.sum((x - mean) ** 2, axis=-1, keepdims=True) / (d_model - 1))
    y_ref = alpha * (x - mean) / (std + eps) + bias

    assert y.shape == x.shape
    assert jnp.allclose(y, y_ref, atol=1e-5, rtol=1e-5), "mismatch vs reference"

    # TODO(synk): LRP relevance backprop (attribution-time logic in models_phy_lrp)
    # is not part of the forward pass and is not implemented here.
    print("KERNEL_OK")
</pallas_src>

<mosaic_0001>
module attributes {stable_mosaic.version = 11 : i64} {
  func.func @_norm_kernel(%arg0: i32, %arg1: memref<8x128xf32, #tpu.memory_space<vmem>>, %arg2: memref<1x128xf32, #tpu.memory_space<vmem>>, %arg3: memref<1x128xf32, #tpu.memory_space<vmem>>, %arg4: memref<8x128xf32, #tpu.memory_space<vmem>>) attributes {dimension_semantics = [#tpu.dimension_semantics<parallel>], iteration_bounds = array<i64: 2>, scalar_prefetch = 0 : i64, scratch_operands = 0 : i64, tpu.core_type = #tpu.core_type<tc>, window_params = [{transform_indices = @transform_0, window_bounds = array<i64: 8, 128>}, {pipeline_mode = #tpu.pipeline_mode<synchronous>, transform_indices = @transform_1, window_bounds = array<i64: 1, 128>}, {pipeline_mode = #tpu.pipeline_mode<synchronous>, transform_indices = @transform_2, window_bounds = array<i64: 1, 128>}, {transform_indices = @transform_3, window_bounds = array<i64: 8, 128>}]} {
    %c0 = arith.constant 0 : index
    %c0_0 = arith.constant 0 : index
    %0 = vector.load %arg1[%c0, %c0_0] : memref<8x128xf32, #tpu.memory_space<vmem>>, vector<8x128xf32>
    %cst = arith.constant dense<0.000000e+00> : vector<8xf32>
    %1 = vector.multi_reduction <add>, %0, %cst [1] : vector<8x128xf32> to vector<8xf32>
    %2 = vector.shape_cast %1 : vector<8xf32> to vector<8x1xf32>
    %3 = arith.mulf %0, %0 : vector<8x128xf32>
    %cst_1 = arith.constant dense<0.000000e+00> : vector<8xf32>
    %4 = vector.multi_reduction <add>, %3, %cst_1 [1] : vector<8x128xf32> to vector<8xf32>
    %5 = vector.shape_cast %4 : vector<8xf32> to vector<8x1xf32>
    %cst_2 = arith.constant 7.812500e-03 : f32
    %6 = vector.broadcast %cst_2 : f32 to vector<8x1xf32>
    %7 = arith.mulf %2, %6 : vector<8x1xf32>
    %8 = arith.mulf %2, %7 : vector<8x1xf32>
    %9 = arith.subf %5, %8 : vector<8x1xf32>
    %cst_3 = arith.constant 0.000000e+00 : f32
    %10 = vector.broadcast %cst_3 : f32 to vector<8x1xf32>
    %11 = arith.maximumf %9, %10 : vector<8x1xf32>
    %cst_4 = arith.constant 0.00787401571 : f32
    %12 = vector.broadcast %cst_4 : f32 to vector<8x1xf32>
    %13 = arith.mulf %11, %12 : vector<8x1xf32>
    %14 = math.sqrt %13 : vector<8x1xf32>
    %cst_5 = arith.constant 9.99999997E-7 : f32
    %15 = vector.broadcast %cst_5 : f32 to vector<8x1xf32>
    %16 = arith.addf %14, %15 : vector<8x1xf32>
    %cst_6 = arith.constant 1.000000e+00 : f32
    %17 = vector.broadcast %cst_6 : f32 to vector<8x1xf32>
    %18 = arith.divf %17, %16 : vector<8x1xf32>
    %19 = vector.broadcast %7 : vector<8x1xf32> to vector<8x128xf32>
    %20 = arith.subf %0, %19 : vector<8x128xf32>
    %21 = vector.broadcast %18 : vector<8x1xf32> to vector<8x128xf32>
    %22 = arith.mulf %20, %21 : vector<8x128xf32>
    %c0_7 = arith.constant 0 : index
    %c0_8 = arith.constant 0 : index
    %23 = vector.load %arg2[%c0_7, %c0_8] : memref<1x128xf32, #tpu.memory_space<vmem>>, vector<1x128xf32>
    %24 = vector.broadcast %23 : vector<1x128xf32> to vector<8x128xf32>
    %25 = arith.mulf %22, %24 : vector<8x128xf32>
    %c0_9 = arith.constant 0 : index
    %c0_10 = arith.constant 0 : index
    %26 = vector.load %arg3[%c0_9, %c0_10] : memref<1x128xf32, #tpu.memory_space<vmem>>, vector<1x128xf32>
    %27 = vector.broadcast %26 : vector<1x128xf32> to vector<8x128xf32>
    %28 = arith.addf %25, %27 : vector<8x128xf32>
    %c0_11 = arith.constant 0 : index
    %c0_12 = arith.constant 0 : index
    %29 = vector.load %arg4[%c0_11, %c0_12] : memref<8x128xf32, #tpu.memory_space<vmem>>, vector<8x128xf32>
    tpu.vector_store %arg4[%c0_11, %c0_12], %28 {strides = array<i32>} : memref<8x128xf32, #tpu.memory_space<vmem>>, vector<8x128xf32>,
    return
  }
  func.func @transform_0(%arg0: i32) -> (i32, i32) {
    %c0_i32 = arith.constant 0 : i32
    %c0_i32_0 = arith.constant 0 : i32
    return %arg0, %c0_i32 : i32, i32
  }
  func.func @transform_1(%arg0: i32) -> (i32, i32) {
    %c0_i32 = arith.constant 0 : i32
    %c0_i32_0 = arith.constant 0 : i32
    %c0_i32_1 = arith.constant 0 : i32
    return %c0_i32, %c0_i32_0 : i32, i32
  }
  func.func @transform_2(%arg0: i32) -> (i32, i32) {
    %c0_i32 = arith.constant 0 : i32
    %c0_i32_0 = arith.constant 0 : i32
    %c0_i32_1 = arith.constant 0 : i32
    return %c0_i32, %c0_i32_0 : i32, i32
  }
  func.func @transform_3(%arg0: i32) -> (i32, i32) {
    %c0_i32 = arith.constant 0 : i32
    %c0_i32_0 = arith.constant 0 : i32
    return %arg0, %c0_i32 : i32, i32
  }
}

</mosaic_0001>

<llo_original>
// kernel: tpu_custom_call.1
$region0: #{tpu_custom_call.1}
  #allocation0 [shape = 'u32[]', space=smem, size = 0x4, offset = 0x4, fixed_abs, tag = 'smem constant byte address 0x4 - core index']
  #allocation1 [shape = 'u32[72,128]{1,0:T(1,128)}', space=vmem, size = 0x9000, scoped, tag = 'internal scratch']
  %s0 = inlined_call_operand.hbm [shape: f32[16,128], index: 0, kind: input, shape index: {}]
  %s1 = inlined_call_operand.hbm [shape: f32[1,128], index: 1, kind: input, shape index: {}]
  %s2 = inlined_call_operand.vmem [shape: f32[1,128], index: 2, kind: input, shape index: {}]
  %s3 = inlined_call_operand.hbm [shape: f32[16,128], index: 3, kind: output, shape index: {}]
  %s4 = sld [smem:[#allocation0]]
  $region53: #{tpu_custom_call.1} parent=0
    _
  %s6 = ssub.s32 1, %s4
  %s7 = scalar_select 0, %s6, %s4
  $region1: #{tpu_custom_call.1} parent=0
    #allocation2 [shape = 'u8[8192]{0}', space=vmem, size = 0x2000, scoped, tag = 'input window, operand 0']
    #allocation3 [shape = 's32[2]{0}', space=sflag, size = 0x8, scoped, tag = 'scoped memory for tpu_custom_call.1']
    #allocation4 [shape = 's32[2]{0}', space=sflag, size = 0x8, scoped, tag = 'scoped memory for tpu_custom_call.1']
    #allocation5 [shape = 'u8[512]{0}', space=vmem, size = 0x400, scoped, tag = 'input window, operand 1, single buffered']
    #allocation6 [shape = 's32[1]{0}', space=sflag, size = 0x4, scoped, tag = 'scoped memory for tpu_custom_call.1']
    #allocation7 [shape = 'u8[8192]{0}', space=vmem, size = 0x2000, scoped, tag = 'output window, operand 0']
    %8 = vsyncpa [#allocation3], 0
    %s9 = scalar_lea.sflag [#allocation3], 1
    %10 = vsyncpa %s9, 0
    %11 = vsyncpa [#allocation6], 0
    %12 = vsyncpa [#allocation4], 0
    %s13 = scalar_lea.sflag [#allocation4], 1
    %14 = vsyncpa %s13, 0
    loop: start=0, step=1, limit=4
    $region2: #{tpu_custom_call.1} parent=1 // loop_pre_header
      _
    $region3: #{tpu_custom_call.1} parent=1 // loop_header
      %s16 = sphi 0, %s20
      %p17 = scmp.ge.s32.totalorder %s16, 4
      %s26 = sphi 0, %s28
      %s29 = sphi 0, %s26
      %s30 = sphi 0, %s29
      %s46 = sphi 0, %s30
      %s50 = sphi 0, %s50
      %s52 = sphi 0, %s50
      %s53 = sphi 0, %s52
      %s67 = sphi 0, %s53
      %s71 = sphi 0, %s71
      %s73 = sphi 0, %s71
      %s74 = sphi 0, %s73
      %s88 = sphi 0, %s74
      %s94 = sphi 0, %s96
      %s97 = sphi 0, %s94
      %s98 = sphi 0, %s97
      %s114 = sphi 0, %s98
    $region4: #{tpu_custom_call.1} parent=1 // loop_header_branch
      %19 = sbr.rel (%p17) target = $region8
    $region5: #{tpu_custom_call.1} parent=1 // loop_body
      %s21 = ssub.s32 %s16, 1
      %s22 = ssub.s32 %s16, 2
      %s23 = sadd.s32 %s16, 1
      %s24 = ssub.s32 %s16, %s23
      %p25 = scmp.eq.s32.totalorder %s24, 0
      %s27 = sadd.s32 %s26, 1
      %s28 = scalar_select %p25, %s26, %s27
      %p31 = pneg %p25
      %p32 = scmp.eq.s32.totalorder %s16, 1
      %p33 = por %p31, %p32
      %p34 = scmp.ne.s32.totalorder %s26, %s29
      %p35 = scmp.eq.s32.totalorder %s16, 0
      %p36 = por %p34, %p35
      %p37 = scmp.ne.s32.totalorder %s26, %s29
      %p38 = scmp.eq.s32.totalorder %s21, 1
      %p39 = por %p37, %p38
      %p40 = scmp.ne.s32.totalorder %s29, %s30
      %p41 = scmp.eq.s32.totalorder %s21, 0
      %p42 = por %p40, %p41
      %p43 = scmp.ne.s32.totalorder %s29, %s30
      %p44 = scmp.eq.s32.totalorder %s22, 1
      %p45 = por %p43, %p44
      %p47 = scmp.ne.s32.totalorder %s30, %s46
      %p48 = scmp.eq.s32.totalorder %s22, 0
      %p49 = por %p47, %p48
      %s51 = sadd.s32 %s50, 1
      %p54 = scmp.eq.s32.totalorder %s16, 1
      %p55 = scmp.ne.s32.totalorder %s50, %s52
      %p56 = scmp.eq.s32.totalorder %s16, 0
      %p57 = por %p55, %p56
      %p58 = scmp.ne.s32.totalorder %s50, %s52
      %p59 = scmp.eq.s32.totalorder %s21, 1
      %p60 = por %p58, %p59
      %p61 = scmp.ne.s32.totalorder %s52, %s53
      %p62 = scmp.eq.s32.totalorder %s21, 0
      %p63 = por %p61, %p62
      %p64 = scmp.ne.s32.totalorder %s52, %s53
      %p65 = scmp.eq.s32.totalorder %s22, 1
      %p66 = por %p64, %p65
      %p68 = scmp.ne.s32.totalorder %s53, %s67
      %p69 = scmp.eq.s32.totalorder %s22, 0
      %p70 = por %p68, %p69
      %s72 = sadd.s32 %s71, 1
      %p75 = scmp.eq.s32.totalorder %s16, 1
      %p76 = scmp.ne.s32.totalorder %s71, %s73
      %p77 = scmp.eq.s32.totalorder %s16, 0
      %p78 = por %p76, %p77
      %p79 = scmp.ne.s32.totalorder %s71, %s73
      %p80 = scmp.eq.s32.totalorder %s21, 1
      %p81 = por %p79, %p80
      %p82 = scmp.ne.s32.totalorder %s73, %s74
      %p83 = scmp.eq.s32.totalorder %s21, 0
      %p84 = por %p82, %p83
      %p85 = scmp.ne.s32.totalorder %s73, %s74
      %p86 = scmp.eq.s32.totalorder %s22, 1
      %p87 = por %p85, %p86
      %p89 = scmp.ne.s32.totalorder %s74, %s88
      %p90 = scmp.eq.s32.totalorder %s22, 0
      %p91 = por %p89, %p90
      %s92 = ssub.s32 %s16, %s23
      %p93 = scmp.eq.s32.totalorder %s92, 0
      %s95 = sadd.s32 %s94, 1
      %s96 = scalar_select %p93, %s94, %s95
      %p99 = pneg %p93
      %p100 = scmp.eq.s32.totalorder %s16, 1
      %p101 = por %p99, %p100
      %p102 = scmp.ne.s32.totalorder %s94, %s97
      %p103 = scmp.eq.s32.totalorder %s16, 0
      %p104 = por %p102, %p103
      %p105 = scmp.ne.s32.totalorder %s94, %s97
      %p106 = scmp.eq.s32.totalorder %s21, 1
      %p107 = por %p105, %p106
      %p108 = scmp.ne.s32.totalorder %s97, %s98
      %p109 = scmp.eq.s32.totalorder %s21, 0
      %p110 = por %p108, %p109
      %p111 = scmp.ne.s32.totalorder %s97, %s98
      %p112 = scmp.eq.s32.totalorder %s22, 1
      %p113 = por %p111, %p112
      %p115 = scmp.ne.s32.totalorder %s98, %s114
      %p116 = scmp.eq.s32.totalorder %s22, 0
      %p117 = por %p115, %p116
      %p118 = scmp.le.s32.totalorder 1, %s16
      %p119 = scmp.lt.s32.totalorder %s16, 3
      %p120 = pnand %p118, %p119
      %p121 = pneg %p120
      // Predicated region
      $region9: #{tpu_custom_call.1} parent=5 // pred_check
        _
      $region10: #{tpu_custom_call.1} parent=5 // pred_check_branch
        %123 = sbr.rel (%p120) target = $region12
      $region11: #{tpu_custom_call.1} parent=5 // pred_region
        %s124 = ssub.s32 %s16, 1
        // Predicated region
        $region13: #{tpu_custom_call.1} parent=11 // pred_check
          %p125 = pneg %p63
        $region14: #{tpu_custom_call.1} parent=11 // pred_check_branch
          %127 = sbr.rel (%p125) target = $region16
        $region15: #{tpu_custom_call.1} parent=11 // pred_region
          %129 = vsyncadd [#allocation6], 0
          %s131 = sshll.u32 %s1, 4
          %s132 = int_to_ptr.hbm [resolvable:$true] %s131
          %s133 = sshll.u32 [#allocation5], 4
          %s134 = int_to_ptr.vmem [resolvable:$true] %s133
          %136 = dma.hbm_to_vmem [thread:$0]  %s132, 16, %s134, [#allocation6]
        $region16: #{tpu_custom_call.1} parent=11 // pred_fallthru
          _
        // Predicated region
        $region17: #{tpu_custom_call.1} parent=11 // pred_check
          %p137 = pneg %p84
        $region18: #{tpu_custom_call.1} parent=11 // pred_check_branch
          %139 = sbr.rel (%p137) target = $region20
        $region19: #{tpu_custom_call.1} parent=11 // pred_region
          _
        $region20: #{tpu_custom_call.1} parent=11 // pred_fallthru
          _
      $region12: #{tpu_custom_call.1} parent=5 // pred_fallthru
        _
      %p140 = scmp.lt.s32.totalorder %s16, 2
      // Predicated region
      $region21: #{tpu_custom_call.1} parent=5 // pred_check
        %p141 = pneg %p140
      $region22: #{tpu_custom_call.1} parent=5 // pred_check_branch
        %143 = sbr.rel (%p141) target = $region24
      $region23: #{tpu_custom_call.1} parent=5 // pred_region
        // Predicated region
        $region25: #{tpu_custom_call.1} parent=23 // pred_check
          %p144 = pneg %p36
        $region26: #{tpu_custom_call.1} parent=23 // pred_check_branch
          %146 = sbr.rel (%p144) target = $region28
        $region27: #{tpu_custom_call.1} parent=23 // pred_region
          %s147 = sand.u32 %s26, 1
          %s148 = scalar_lea.sflag [#allocation3], %s147
          %s149 = sand.u32 %s26, 1
          %s150 = smul.addr %s149, 8
          %s151 = scalar_lea.vmem [#allocation2], %s150
          %153 = vsyncadd %s148, 0
          %s154 = smul.addr %s16, 8
          %s155 = scalar_lea.hbm %s0, %s154
          %s157 = sshll.u32 %s155, 4
          %s158 = int_to_ptr.hbm [resolvable:$true] %s157
          %s159 = sshll.u32 %s151, 4
          %s160 = int_to_ptr.vmem [resolvable:$true] %s159
          %162 = dma.hbm_to_vmem [thread:$0]  %s158, 128, %s160, %s148
        $region28: #{tpu_custom_call.1} parent=23 // pred_fallthru
          _
      $region24: #{tpu_custom_call.1} parent=5 // pred_fallthru
        _
      %p163 = scmp.le.s32.totalorder 1, %s16
      %p164 = scmp.lt.s32.totalorder %s16, 3
      %p165 = pnand %p163, %p164
      %p166 = pneg %p165
      // Predicated region
      $region29: #{tpu_custom_call.1} parent=5 // pred_check
        _
      $region30: #{tpu_custom_call.1} parent=5 // pred_check_branch
        %168 = sbr.rel (%p165) target = $region32
      $region31: #{tpu_custom_call.1} parent=5 // pred_region
        %s169 = ssub.s32 %s16, 1
        %s170 = sand.u32 %s29, 1
        %s171 = scalar_lea.sflag [#allocation3], %s170
        %s172 = sand.u32 %s29, 1
        %s173 = smul.addr %s172, 8
        %s174 = scalar_lea.vmem [#allocation2], %s173
        // Predicated region
        $region33: #{tpu_custom_call.1} parent=31 // pred_check
          %p175 = pneg %p42
        $region34: #{tpu_custom_call.1} parent=31 // pred_check_branch
          %177 = sbr.rel (%p175) target = $region36
        $region35: #{tpu_custom_call.1} parent=31 // pred_region
          %179 = dma.done %s171, 128
        $region36: #{tpu_custom_call.1} parent=31 // pred_fallthru
          _
        // Predicated region
        $region37: #{tpu_custom_call.1} parent=31 // pred_check
          %p180 = pneg %p63
        $region38: #{tpu_custom_call.1} parent=31 // pred_check_branch
          %182 = sbr.rel (%p180) target = $region40
        $region39: #{tpu_custom_call.1} parent=31 // pred_region
          %184 = dma.done [#allocation6], 16
        $region40: #{tpu_custom_call.1} parent=31 // pred_fallthru
          _
        %s185 = sand.u32 %s29, 1
        %s186 = scalar_lea.sflag [#allocation3], %s185
        %s187 = sand.u32 %s29, 1
        %s188 = smul.addr %s187, 8
        %s189 = scalar_lea.vmem [#allocation2], %s188
        %p190 = pneg %p42
        %p191 = pneg %p39
        %p192 = pneg %p63
        %p193 = pneg %p60
        %p194 = pneg %p84
        %p195 = pneg %p81
        %p196 = pneg %p110
        %p197 = pneg %p107
        %s198 = sand.u32 %s97, 1
        %s199 = scalar_lea.sflag [#allocation4], %s198
        %s200 = sand.u32 %s97, 1
        %s201 = smul.addr %s200, 8
        %s202 = scalar_lea.vmem [#allocation7], %s201
        %v203 = vld [vmem:[%s174] sm:$0xff]
        %204 = vadd.xlane.f32.xlu0 %v203
        %v205 = vpop.xlane.xlu0 %204
        %v206 = vmul.f32 %v203, %v203
        %207 = vadd.xlane.f32.xlu0 %v206
        %v208 = vpop.xlane.xlu0 %207
        %v209 = vmul.f32 %v205, 0.0078125
        %v210 = vmul.f32 %v205, %v209
        %v211 = vsub.f32 %v208, %v210
        %v212 = vmax.f32 %v211, 0.0
        %v213 = vmul.f32 %v212, 0.007874016
        %v214 = vrsqrt.pop %v213
        %v215 = vmul.f32 %v214, %v213
        %v216 = vmul.f32 %v215, %v214
        %v217 = vmul.f32 0.5, %v216
        %v218 = vsub.f32 1.5, %v217
        %v219 = vmul.f32 %v214, %v218
        %v220 = vmul.f32 %v213, %v219
        %vm221 = vcmp.eq.f32.partialorder %v213, inf
        %v222 = vsel %vm221, %v213, %v220
        %vm223 = vcmp.eq.f32.partialorder %v213, 0.0
        %v224 = vand.u32 %v213, 2147483648
        %v225 = vsel %vm223, %v224, %v222
        %v226 = vadd.f32 %v225, 1e-06
        %v227 = vrcp.pop %v226
        %v228 = vmul.f32 %v226, %v227
        %v229 = vsub.f32 1.0, %v228
        %v230 = vmul.f32 %v227, %v229
        %v231 = vadd.f32 %v227, %v230
        %vm232 = vweird.f32 %v226
        %vm233 = vweird.f32 %v227
        %vm234 = vmor %vm232, %vm233
        %v235 = vsel %vm234, %v227, %v231
        %v236 = vand.u32 2147483647, %v226
        %vm237 = vcmp.eq.f32.partialorder %v236, 8.507059e+37
        %v238 = vand.u32 %v226, 2147483648
        %v239 = vor.u32 1.1754944e-38, %v238
        %v240 = vsel %vm237, %v239, %v235
        %v241 = vmul.f32 1.0, %v240
        %v242 = vsub.f32 %v203, %v209
        %v243 = vmul.f32 %v242, %v241
        %v244 = vld [vmem:[#allocation5] sm:$0x1]
        %v246 = vperm.slane %v244, 0
        %v248 = vmul.f32 %v243, %v246
        %v249 = vld [vmem:[%s2] sm:$0x1]
        %v251 = vperm.slane %v249, 0
        %v253 = vadd.f32 %v248, %v251
        %254 = vst [vmem:[%s202] sm:$0xff] %v253
        %s255 = sand.u32 %s97, 1
        %s256 = scalar_lea.sflag [#allocation4], %s255
        %s257 = sand.u32 %s97, 1
        %s258 = smul.addr %s257, 8
        %s259 = scalar_lea.vmem [#allocation7], %s258
        // Predicated region
        $region41: #{tpu_custom_call.1} parent=31 // pred_check
          %p260 = pneg %p107
        $region42: #{tpu_custom_call.1} parent=31 // pred_check_branch
          %262 = sbr.rel (%p260) target = $region44
        $region43: #{tpu_custom_call.1} parent=31 // pred_region
          %264 = vsyncadd %s256, 0
          %s265 = smul.addr %s21, 8
          %s266 = scalar_lea.hbm %s3, %s265
          %s268 = sshll.u32 %s259, 4
          %s269 = int_to_ptr.vmem [resolvable:$true] %s268
          %s270 = sshll.u32 %s266, 4
          %s271 = int_to_ptr.hbm [resolvable:$true] %s270
          %273 = dma.vmem_to_hbm [thread:$0]  %s269, 128, %s271, %s256
        $region44: #{tpu_custom_call.1} parent=31 // pred_fallthru
          _
      $region32: #{tpu_custom_call.1} parent=5 // pred_fallthru
        _
      %p274 = scmp.le.s32.totalorder 2, %s16
      // Predicated region
      $region45: #{tpu_custom_call.1} parent=5 // pred_check
        %p275 = pneg %p274
      $region46: #{tpu_custom_call.1} parent=5 // pred_check_branch
        %277 = sbr.rel (%p275) target = $region48
      $region47: #{tpu_custom_call.1} parent=5 // pred_region
        %s278 = ssub.s32 %s16, 2
        // Predicated region
        $region49: #{tpu_custom_call.1} parent=47 // pred_check
          %p279 = pneg %p113
        $region50: #{tpu_custom_call.1} parent=47 // pred_check_branch
          %281 = sbr.rel (%p279) target = $region52
        $region51: #{tpu_custom_call.1} parent=47 // pred_region
          %s282 = sand.u32 %s98, 1
          %s283 = scalar_lea.sflag [#allocation4], %s282
          %s284 = sand.u32 %s98, 1
          %s285 = smul.addr %s284, 8
          %s286 = scalar_lea.vmem [#allocation7], %s285
          %288 = dma.done %s283, 128
        $region52: #{tpu_custom_call.1} parent=47 // pred_fallthru
          _
      $region48: #{tpu_custom_call.1} parent=5 // pred_fallthru
        _
    $region6: #{tpu_custom_call.1} parent=1 // loop_footer
      %s20 = sadd.s32 1, %s16
    $region7: #{tpu_custom_call.1} parent=1 // loop_footer_branch
      %15 = sbr.rel target = $region3
    $region8: #{tpu_custom_call.1} parent=1 // loop_exit
      _
    %289 = vsyncpa [#allocation3], 1
    %s290 = scalar_lea.sflag [#allocation3], 1
    %291 = vsyncpa %s290, 1
    %292 = vsyncpa [#allocation6], 1
    %293 = vsyncpa [#allocation4], 1
    %s294 = scalar_lea.sflag [#allocation4], 1
    %295 = vsyncpa %s294, 1

</llo_original>
